<compile_context>
chip_gen: v5e
topology: v5e:2x2
jax: 0.10.0
libtpu: 0.0.40
codegen_flags: <defaults>
</compile_context>

<pallas_src>
import functools

import numpy as np
import jax
import jax.numpy as jnp
from jax.experimental import pallas as pl
from jax.experimental.pallas import tpu as pltpu

_LANE = 128
_SUB = 8


def _round_up(x, m):
    return ((x + m - 1) // m) * m


def _plan_tiling(rows, nc, itemsize, target_block_bytes):
    """Pick (splits, rows-per-block, padded-rows) for the spatial reduction."""
    if rows <= 2 * _SUB:
        # Tiny input: one full-extent block, single grid step.
        return 1, rows, rows
    splits = 2  # 2-way spatial split -> both TensorCores on v7x (harmless on v5e/v6e)
    tr = target_block_bytes // (nc * _LANE * max(int(itemsize), 1))
    tr = max(_SUB, (tr // _SUB) * _SUB)
    tr = min(tr, _round_up(-(-rows // splits), _SUB))
    rows_pad = _round_up(rows, splits * tr)
    return splits, tr, rows_pad


def _dice_partial_kernel(p_ref, t_ref, num_ref, sp_ref, st_ref):
    """Grid: (splits 'parallel', steps 'arbitrary').  Emits lane partial sums."""
    k = pl.program_id(1)

    @pl.when(k == 0)
    def _init():
        num_ref[...] = jnp.zeros_like(num_ref)
        sp_ref[...] = jnp.zeros_like(sp_ref)
        st_ref[...] = jnp.zeros_like(st_ref)

    # Cast on-register (free on the VPU); inputs arrive in their native dtype.
    p = jax.nn.sigmoid(p_ref[...].astype(jnp.float32))   # (NC, TR, 128)
    t = t_ref[...].astype(jnp.float32)                   # (NC, TR, 128)

    # Keep 128-wide lane partials; only the sublane axis is reduced per step.
    num_ref[...] += jnp.sum(p * t, axis=1)[None]          # (1, NC, 128)
    sp_ref[...] += jnp.sum(p, axis=1)[None]
    st_ref[...] += jnp.sum(t, axis=1)[None]


def dice_loss_4mots(predict, target, *, smooth=1.0, target_block_bytes=2 << 20):
    """predict/target: (N, C, ...spatial) arrays (target may hold -1 sentinels)."""
    N, C = predict.shape[0], predict.shape[1]
    S = int(np.prod(predict.shape[2:]))
    NC = N * C

    p_flat = predict.reshape(N, C, S)
    t_flat = target.reshape(N, C, S)

    # Validity mask (target[:, i, 0] != -1) — O(N*C), done in plain JAX.
    valid = (t_flat[:, :, 0] != -1).astype(jnp.float32)    # (N, C)

    rows = -(-S // _LANE)
    itemsize = max(jnp.dtype(predict.dtype).itemsize, jnp.dtype(target.dtype).itemsize)
    splits, tr, rows_pad = _plan_tiling(rows, NC, itemsize, target_block_bytes)
    S_pad = rows_pad * _LANE

    if S_pad != S:
        # Pad predict with the most negative representable value (sigmoid -> 0)
        # and target with 0 so the pad region contributes nothing to any sum.
        if jnp.issubdtype(predict.dtype, jnp.floating):
            neg = jnp.finfo(predict.dtype).min
        else:
            neg = jnp.iinfo(predict.dtype).min
        p_flat = jnp.pad(p_flat, ((0, 0), (0, 0), (0, S_pad - S)), constant_values=neg)
        t_flat = jnp.pad(t_flat, ((0, 0), (0, 0), (0, S_pad - S)), constant_values=0)

    p3 = p_flat.reshape(NC, rows_pad, _LANE)
    t3 = t_flat.reshape(NC, rows_pad, _LANE)

    steps = rows_pad // (splits * tr)
    grid = (splits, steps)

    in_map = lambda c, k: (0, c * steps + k, 0)
    out_map = lambda c, k: (c, 0, 0)

    out_sds = jax.ShapeDtypeStruct((splits, NC, _LANE), jnp.float32)
    num_p, sp_p, st_p = pl.pallas_call(
        _dice_partial_kernel,
        out_shape=(out_sds, out_sds, out_sds),
        grid_spec=pltpu.PrefetchScalarGridSpec(
            num_scalar_prefetch=0,
            grid=grid,
            in_specs=[
                pl.BlockSpec((NC, tr, _LANE), in_map),
                pl.BlockSpec((NC, tr, _LANE), in_map),
            ],
            out_specs=[
                pl.BlockSpec((1, NC, _LANE), out_map),
                pl.BlockSpec((1, NC, _LANE), out_map),
                pl.BlockSpec((1, NC, _LANE), out_map),
            ],
        ),
        compiler_params=pltpu.CompilerParams(
            dimension_semantics=("parallel", "arbitrary")),
    )(p3, t3)

    # Tiny JAX epilogue: collapse split/lane partials, dice, mask, NaN-filter.
    num = jnp.sum(num_p, axis=(0, 2)).reshape(N, C)
    sp = jnp.sum(sp_p, axis=(0, 2)).reshape(N, C)
    st = jnp.sum(st_p, axis=(0, 2)).reshape(N, C)

    dice_loss = 1.0 - 2.0 * num / (sp + st + smooth)                       # (N, C)
    cls_loss = jnp.sum(dice_loss * valid, axis=0) / jnp.sum(valid, axis=0)  # (C,); 0/0 -> NaN
    finite = cls_loss == cls_loss
    total = jnp.sum(jnp.where(finite, cls_loss, 0.0))
    count = jnp.sum(finite.astype(jnp.float32))
    return total / count


def dice_loss_4mots_ref(predict, target, *, num_classes=3, smooth=1.0):
    """Pure-JAX mirror of the PyTorch forward (correctness check)."""
    N = predict.shape[0]
    p = jax.nn.sigmoid(predict.astype(jnp.float32))
    losses = []
    for i in range(num_classes):
        pi = p[:, i].reshape(N, -1)
        ti = target[:, i].reshape(N, -1).astype(jnp.float32)
        num = jnp.sum(pi * ti, axis=1)
        den = jnp.sum(pi, axis=1) + jnp.sum(ti, axis=1) + smooth
        dl = 1.0 - 2.0 * num / den
        mask = ti[:, 0] != -1
        losses.append(jnp.sum(jnp.where(mask, dl, 0.0)) / jnp.sum(mask))
    tl = jnp.stack(losses)
    finite = tl == tl
    return jnp.sum(jnp.where(finite, tl, 0.0)) / jnp.sum(finite.astype(jnp.float32))


if __name__ == "__main__":
    # DiceLoss4MOTS(num_classes=3, weight=None, ignore_index=None), smooth=1
    N, C, H, W = 2, 3, 16, 16
    key = jax.random.PRNGKey(0)
    k_pred, k_tgt = jax.random.split(key)

    predict = jax.random.normal(k_pred, (N, C, H, W), dtype=jnp.float32)
    target = jax.random.bernoulli(k_tgt, 0.5, (N, C, H, W)).astype(jnp.float32)
    # Mark (batch=1, class=2) as "not annotated": exercises target[:, 0] != -1.
    target = target.at[1, 2].set(-1.0)

    loss = jax.block_until_ready(dice_loss_4mots(predict, target, smooth=1.0))
    ref = jax.block_until_ready(
        dice_loss_4mots_ref(predict, target, num_classes=C, smooth=1.0))
    assert np.allclose(np.asarray(loss), np.asarray(ref), rtol=1e-4, atol=1e-5), \
        f"pallas={loss} ref={ref}"

    # Second check: a fully-unannotated class -> per-class NaN -> filtered out.
    target2 = target.at[:, 1].set(-1.0)
    loss2 = jax.block_until_ready(dice_loss_4mots(predict, target2, smooth=1.0))
    ref2 = jax.block_until_ready(
        dice_loss_4mots_ref(predict, target2, num_classes=C, smooth=1.0))
    assert np.allclose(np.asarray(loss2), np.asarray(ref2), rtol=1e-4, atol=1e-5), \
        f"pallas={loss2} ref={ref2}"

    print("KERNEL_OK")
</pallas_src>

<mosaic_0001>
module attributes {stable_mosaic.version = 11 : i64} {
  func.func @_dice_partial_kernel(%arg0: i32, %arg1: i32, %arg2: memref<6x2x128xf32, #tpu.memory_space<vmem>>, %arg3: memref<6x2x128xf32, #tpu.memory_space<vmem>>, %arg4: memref<1x6x128xf32, #tpu.memory_space<vmem>>, %arg5: memref<1x6x128xf32, #tpu.memory_space<vmem>>, %arg6: memref<1x6x128xf32, #tpu.memory_space<vmem>>) attributes {dimension_semantics = [#tpu.dimension_semantics<parallel>, #tpu.dimension_semantics<arbitrary>], iteration_bounds = array<i64: 1, 1>, scalar_prefetch = 0 : i64, scratch_operands = 0 : i64, tpu.core_type = #tpu.core_type<tc>, window_params = [{transform_indices = @transform_0, window_bounds = array<i64: 6, 2, 128>}, {transform_indices = @transform_1, window_bounds = array<i64: 6, 2, 128>}, {transform_indices = @transform_2, window_bounds = array<i64: 1, 6, 128>}, {transform_indices = @transform_3, window_bounds = array<i64: 1, 6, 128>}, {transform_indices = @transform_4, window_bounds = array<i64: 1, 6, 128>}]} {
    %c0_i32 = arith.constant 0 : i32
    %0 = arith.cmpi eq, %arg1, %c0_i32 : i32
    %1 = arith.extui %0 : i1 to i32
    %c0_i32_0 = arith.constant 0 : i32
    %2 = arith.cmpi ne, %1, %c0_i32_0 : i32
    scf.if %2 {
      %cst_27 = arith.constant 0.000000e+00 : f32
      %26 = vector.broadcast %cst_27 : f32 to vector<1x6x128xf32>
      %c0_28 = arith.constant 0 : index
      %c0_29 = arith.constant 0 : index
      %c0_30 = arith.constant 0 : index
      %27 = vector.load %arg4[%c0_28, %c0_29, %c0_30] : memref<1x6x128xf32, #tpu.memory_space<vmem>>, vector<1x6x128xf32>
      tpu.vector_store %arg4[%c0_28, %c0_29, %c0_30], %26 {strides = array<i32>} : memref<1x6x128xf32, #tpu.memory_space<vmem>>, vector<1x6x128xf32>,
      %cst_31 = arith.constant 0.000000e+00 : f32
      %28 = vector.broadcast %cst_31 : f32 to vector<1x6x128xf32>
      %c0_32 = arith.constant 0 : index
      %c0_33 = arith.constant 0 : index
      %c0_34 = arith.constant 0 : index
      %29 = vector.load %arg5[%c0_32, %c0_33, %c0_34] : memref<1x6x128xf32, #tpu.memory_space<vmem>>, vector<1x6x128xf32>
      tpu.vector_store %arg5[%c0_32, %c0_33, %c0_34], %28 {strides = array<i32>} : memref<1x6x128xf32, #tpu.memory_space<vmem>>, vector<1x6x128xf32>,
      %cst_35 = arith.constant 0.000000e+00 : f32
      %30 = vector.broadcast %cst_35 : f32 to vector<1x6x128xf32>
      %c0_36 = arith.constant 0 : index
      %c0_37 = arith.constant 0 : index
      %c0_38 = arith.constant 0 : index
      %31 = vector.load %arg6[%c0_36, %c0_37, %c0_38] : memref<1x6x128xf32, #tpu.memory_space<vmem>>, vector<1x6x128xf32>
      tpu.vector_store %arg6[%c0_36, %c0_37, %c0_38], %30 {strides = array<i32>} : memref<1x6x128xf32, #tpu.memory_space<vmem>>, vector<1x6x128xf32>,
    } else {
    }
    %c0 = arith.constant 0 : index
    %c0_1 = arith.constant 0 : index
    %c0_2 = arith.constant 0 : index
    %3 = vector.load %arg2[%c0, %c0_1, %c0_2] : memref<6x2x128xf32, #tpu.memory_space<vmem>>, vector<6x2x128xf32>
    %4 = arith.negf %3 : vector<6x2x128xf32>
    %5 = math.exp %4 : vector<6x2x128xf32>
    %cst = arith.constant 1.000000e+00 : f32
    %6 = vector.broadcast %cst : f32 to vector<6x2x128xf32>
    %7 = arith.addf %6, %5 : vector<6x2x128xf32>
    %8 = arith.divf %6, %7 : vector<6x2x128xf32>
    %c0_3 = arith.constant 0 : index
    %c0_4 = arith.constant 0 : index
    %c0_5 = arith.constant 0 : index
    %9 = vector.load %arg3[%c0_3, %c0_4, %c0_5] : memref<6x2x128xf32, #tpu.memory_space<vmem>>, vector<6x2x128xf32>
    %c0_6 = arith.constant 0 : index
    %c0_7 = arith.constant 0 : index
    %c0_8 = arith.constant 0 : index
    %10 = vector.load %arg4[%c0_6, %c0_7, %c0_8] : memref<1x6x128xf32, #tpu.memory_space<vmem>>, vector<1x6x128xf32>
    %11 = arith.mulf %8, %9 : vector<6x2x128xf32>
    %cst_9 = arith.constant dense<0.000000e+00> : vector<6x128xf32>
    %12 = vector.multi_reduction <add>, %11, %cst_9 [1] : vector<6x2x128xf32> to vector<6x128xf32>
    %13 = vector.shape_cast %12 : vector<6x128xf32> to vector<1x6x128xf32>
    %14 = arith.addf %10, %13 : vector<1x6x128xf32>
    %c0_10 = arith.constant 0 : index
    %c0_11 = arith.constant 0 : index
    %c0_12 = arith.constant 0 : index
    %15 = vector.load %arg4[%c0_10, %c0_11, %c0_12] : memref<1x6x128xf32, #tpu.memory_space<vmem>>, vector<1x6x128xf32>
    tpu.vector_store %arg4[%c0_10, %c0_11, %c0_12], %14 {strides = array<i32>} : memref<1x6x128xf32, #tpu.memory_space<vmem>>, vector<1x6x128xf32>,
    %c0_13 = arith.constant 0 : index
    %c0_14 = arith.constant 0 : index
    %c0_15 = arith.constant 0 : index
    %16 = vector.load %arg5[%c0_13, %c0_14, %c0_15] : memref<1x6x128xf32, #tpu.memory_space<vmem>>, vector<1x6x128xf32>
    %cst_16 = arith.constant dense<0.000000e+00> : vector<6x128xf32>
    %17 = vector.multi_reduction <add>, %8, %cst_16 [1] : vector<6x2x128xf32> to vector<6x128xf32>
    %18 = vector.shape_cast %17 : vector<6x128xf32> to vector<1x6x128xf32>
    %19 = arith.addf %16, %18 : vector<1x6x128xf32>
    %c0_17 = arith.constant 0 : index
    %c0_18 = arith.constant 0 : index
    %c0_19 = arith.constant 0 : index
    %20 = vector.load %arg5[%c0_17, %c0_18, %c0_19] : memref<1x6x128xf32, #tpu.memory_space<vmem>>, vector<1x6x128xf32>
    tpu.vector_store %arg5[%c0_17, %c0_18, %c0_19], %19 {strides = array<i32>} : memref<1x6x128xf32, #tpu.memory_space<vmem>>, vector<1x6x128xf32>,
    %c0_20 = arith.constant 0 : index
    %c0_21 = arith.constant 0 : index
    %c0_22 = arith.constant 0 : index
    %21 = vector.load %arg6[%c0_20, %c0_21, %c0_22] : memref<1x6x128xf32, #tpu.memory_space<vmem>>, vector<1x6x128xf32>
    %cst_23 = arith.constant dense<0.000000e+00> : vector<6x128xf32>
    %22 = vector.multi_reduction <add>, %9, %cst_23 [1] : vector<6x2x128xf32> to vector<6x128xf32>
    %23 = vector.shape_cast %22 : vector<6x128xf32> to vector<1x6x128xf32>
    %24 = arith.addf %21, %23 : vector<1x6x128xf32>
    %c0_24 = arith.constant 0 : index
    %c0_25 = arith.constant 0 : index
    %c0_26 = arith.constant 0 : index
    %25 = vector.load %arg6[%c0_24, %c0_25, %c0_26] : memref<1x6x128xf32, #tpu.memory_space<vmem>>, vector<1x6x128xf32>
    tpu.vector_store %arg6[%c0_24, %c0_25, %c0_26], %24 {strides = array<i32>} : memref<1x6x128xf32, #tpu.memory_space<vmem>>, vector<1x6x128xf32>,
    return
  }
  func.func @transform_0(%arg0: i32, %arg1: i32) -> (i32, i32, i32) {
    %c1_i32 = arith.constant 1 : i32
    %0 = arith.muli %arg0, %c1_i32 : i32
    %1 = arith.addi %0, %arg1 : i32
    %c0_i32 = arith.constant 0 : i32
    %c0_i32_0 = arith.constant 0 : i32
    %c0_i32_1 = arith.constant 0 : i32
    return %c0_i32, %1, %c0_i32_0 : i32, i32, i32
  }
  func.func @transform_1(%arg0: i32, %arg1: i32) -> (i32, i32, i32) {
    %c1_i32 = arith.constant 1 : i32
    %0 = arith.muli %arg0, %c1_i32 : i32
    %1 = arith.addi %0, %arg1 : i32
    %c0_i32 = arith.constant 0 : i32
    %c0_i32_0 = arith.constant 0 : i32
    %c0_i32_1 = arith.constant 0 : i32
    return %c0_i32, %1, %c0_i32_0 : i32, i32, i32
  }
  func.func @transform_2(%arg0: i32, %arg1: i32) -> (i32, i32, i32) {
    %c0_i32 = arith.constant 0 : i32
    %c0_i32_0 = arith.constant 0 : i32
    %c0_i32_1 = arith.constant 0 : i32
    return %arg0, %c0_i32, %c0_i32_0 : i32, i32, i32
  }
  func.func @transform_3(%arg0: i32, %arg1: i32) -> (i32, i32, i32) {
    %c0_i32 = arith.constant 0 : i32
    %c0_i32_0 = arith.constant 0 : i32
    %c0_i32_1 = arith.constant 0 : i32
    return %arg0, %c0_i32, %c0_i32_0 : i32, i32, i32
  }
  func.func @transform_4(%arg0: i32, %arg1: i32) -> (i32, i32, i32) {
    %c0_i32 = arith.constant 0 : i32
    %c0_i32_0 = arith.constant 0 : i32
    %c0_i32_1 = arith.constant 0 : i32
    return %arg0, %c0_i32, %c0_i32_0 : i32, i32, i32
  }
}

</mosaic_0001>

<llo_original>
// kernel: tpu_custom_call.1
$region0: #{tpu_custom_call.1}
  #allocation0 [shape = 'u32[]', space=smem, size = 0x4, offset = 0x4, fixed_abs, tag = 'smem constant byte address 0x4 - core index']
  #allocation1 [shape = 'u32[72,128]{1,0:T(1,128)}', space=vmem, size = 0x9000, scoped, tag = 'internal scratch']
  %s0 = inlined_call_operand.hbm [shape: f32[6,2,128], index: 0, kind: input, shape index: {}]
  %s1 = inlined_call_operand.hbm [shape: f32[6,2,128], index: 1, kind: input, shape index: {}]
  %s2 = inlined_call_operand.vmem [shape: f32[1,6,128], index: 2, kind: output, shape index: {0}]
  %s3 = inlined_call_operand.vmem [shape: f32[1,6,128], index: 3, kind: output, shape index: {1}]
  %s4 = inlined_call_operand.vmem [shape: f32[1,6,128], index: 4, kind: output, shape index: {2}]
  %5 = xla_tuple %s2, %s3, %s4
  %s6 = sld [smem:[#allocation0]]
  $region46: #{tpu_custom_call.1} parent=0
    _
  %s8 = ssub.s32 1, %s6
  %s9 = scalar_select 0, %s8, %s6
  $region1: #{tpu_custom_call.1} parent=0
    #allocation2 [shape = 'u8[6144]{0}', space=vmem, size = 0x1800, scoped, tag = 'input window, operand 0, single buffered']
    #allocation3 [shape = 's32[1]{0}', space=sflag, size = 0x4, scoped, tag = 'scoped memory for tpu_custom_call.1']
    #allocation4 [shape = 'u8[6144]{0}', space=vmem, size = 0x1800, scoped, tag = 'input window, operand 1, single buffered']
    #allocation5 [shape = 's32[1]{0}', space=sflag, size = 0x4, scoped, tag = 'scoped memory for tpu_custom_call.1']
    %10 = vsyncpa [#allocation3], 0
    %11 = vsyncpa [#allocation5], 0
    // Predicated region
    $region2: #{tpu_custom_call.1} parent=1 // pred_check
      _
    $region3: #{tpu_custom_call.1} parent=1 // pred_check_branch
      %13 = sbr.rel (0) target = $region5
    $region4: #{tpu_custom_call.1} parent=1 // pred_region
      %s14 = sadd.s32 0, 0
      %16 = vsyncadd [#allocation3], 0
      %s17 = smul.addr %s14, 2
      %s18 = scalar_lea.hbm %s0, %s17
      %s19 = sshll.u32 %s18, 4
      %s20 = int_to_ptr.hbm [resolvable:$true] %s19
      %s21 = sshll.u32 [#allocation2], 4
      %s22 = int_to_ptr.vmem [resolvable:$true] %s21
      %27 = dma.hbm_to_vmem [thread:$0]  %s20, 192, %s22, [#allocation3], 32, 32, 2
    $region5: #{tpu_custom_call.1} parent=1 // pred_fallthru
      _
    // Predicated region
    $region6: #{tpu_custom_call.1} parent=1 // pred_check
      _
    $region7: #{tpu_custom_call.1} parent=1 // pred_check_branch
      %29 = sbr.rel (0) target = $region9
    $region8: #{tpu_custom_call.1} parent=1 // pred_region
      %s30 = sadd.s32 0, 0
      %32 = vsyncadd [#allocation5], 0
      %s33 = smul.addr %s30, 2
      %s34 = scalar_lea.hbm %s1, %s33
      %s35 = sshll.u32 %s34, 4
      %s36 = int_to_ptr.hbm [resolvable:$true] %s35
      %s37 = sshll.u32 [#allocation4], 4
      %s38 = int_to_ptr.vmem [resolvable:$true] %s37
      %43 = dma.hbm_to_vmem [thread:$0]  %s36, 192, %s38, [#allocation5], 32, 32, 2
    $region9: #{tpu_custom_call.1} parent=1 // pred_fallthru
      _
    // Predicated region
    $region10: #{tpu_custom_call.1} parent=1 // pred_check
      _
    $region11: #{tpu_custom_call.1} parent=1 // pred_check_branch
      %45 = sbr.rel (0) target = $region13
    $region12: #{tpu_custom_call.1} parent=1 // pred_region
      %47 = dma.done [#allocation3], 192
    $region13: #{tpu_custom_call.1} parent=1 // pred_fallthru
      _
    // Predicated region
    $region14: #{tpu_custom_call.1} parent=1 // pred_check
      _
    $region15: #{tpu_custom_call.1} parent=1 // pred_check_branch
      %49 = sbr.rel (0) target = $region17
    $region16: #{tpu_custom_call.1} parent=1 // pred_region
      %51 = dma.done [#allocation5], 192
    $region17: #{tpu_custom_call.1} parent=1 // pred_fallthru
      _
    %s52 = sadd.s32 0, 0
    %s53 = sadd.s32 0, 0
    %p54 = scmp.eq.s32.totalorder 0, 0
    // Predicated region
    $region18: #{tpu_custom_call.1} parent=1 // pred_check
      %p55 = pneg %p54
    $region19: #{tpu_custom_call.1} parent=1 // pred_check_branch
      %57 = sbr.rel (%p55) target = $region21
    $region20: #{tpu_custom_call.1} parent=1 // pred_region
      %58 = vst [vmem:[%s2] sm:$0x3f] 0.0
      %59 = vst [vmem:[%s3] sm:$0x3f] 0.0
      %60 = vst [vmem:[%s4] sm:$0x3f] 0.0
    $region21: #{tpu_custom_call.1} parent=1 // pred_fallthru
      _
    %v61 = vld [vmem:[#allocation2] sm:$0x3]
    %v62 = vld [vmem:[#allocation2 + $0x2] sm:$0x3]
    %v63 = vld [vmem:[#allocation2 + $0x4] sm:$0x3]
    %v64 = vld [vmem:[#allocation2 + $0x6] sm:$0x3]
    %v65 = vld [vmem:[#allocation2 + $0x8] sm:$0x3]
    %v66 = vld [vmem:[#allocation2 + $0xa] sm:$0x3]
    %v67 = vxor.u32 %v61, 2147483648
    %v68 = vxor.u32 %v62, 2147483648
    %v69 = vxor.u32 %v63, 2147483648
    %v70 = vxor.u32 %v64, 2147483648
    %v71 = vxor.u32 %v65, 2147483648
    %v72 = vxor.u32 %v66, 2147483648
    %v73 = vmul.f32 %v67, 1.442695
    %v74 = vpow.pop %v73
    %v75 = vmul.f32 %v68, 1.442695
    %v76 = vpow.pop %v75
    %v77 = vmul.f32 %v69, 1.442695
    %v78 = vpow.pop %v77
    %v79 = vmul.f32 %v70, 1.442695
    %v80 = vpow.pop %v79
    %v81 = vmul.f32 %v71, 1.442695
    %v82 = vpow.pop %v81
    %v83 = vmul.f32 %v72, 1.442695
    %v84 = vpow.pop %v83
    %v85 = vadd.f32 %v74, 1.0
    %v86 = vadd.f32 %v76, 1.0
    %v87 = vadd.f32 %v78, 1.0
    %v88 = vadd.f32 %v80, 1.0
    %v89 = vadd.f32 %v82, 1.0
    %v90 = vadd.f32 %v84, 1.0
    %v91 = vrcp.pop %v85
    %v92 = vmul.f32 %v85, %v91
    %v93 = vsub.f32 1.0, %v92
    %v94 = vmul.f32 %v91, %v93
    %v95 = vadd.f32 %v91, %v94
    %vm96 = vweird.f32 %v85
    %vm97 = vweird.f32 %v91
    %vm98 = vmor %vm96, %vm97
    %v99 = vsel %vm98, %v91, %v95
    %v100 = vand.u32 2147483647, %v85
    %vm101 = vcmp.eq.f32.partialorder %v100, 8.507059e+37
    %v102 = vand.u32 %v85, 2147483648
    %v103 = vor.u32 1.1754944e-38, %v102
    %v104 = vsel %vm101, %v103, %v99
    %v105 = vmul.f32 1.0, %v104
    %v106 = vrcp.pop %v86
    %v107 = vmul.f32 %v86, %v106
    %v108 = vsub.f32 1.0, %v107
    %v109 = vmul.f32 %v106, %v108
    %v110 = vadd.f32 %v106, %v109
    %vm111 = vweird.f32 %v86
    %vm112 = vweird.f32 %v106
    %vm113 = vmor %vm111, %vm112
    %v114 = vsel %vm113, %v106, %v110
    %v115 = vand.u32 2147483647, %v86
    %vm116 = vcmp.eq.f32.partialorder %v115, 8.507059e+37
    %v117 = vand.u32 %v86, 2147483648
    %v118 = vor.u32 1.1754944e-38, %v117
    %v119 = vsel %vm116, %v118, %v114
    %v120 = vmul.f32 1.0, %v119
    %v121 = vrcp.pop %v87
    %v122 = vmul.f32 %v87, %v121
    %v123 = vsub.f32 1.0, %v122
    %v124 = vmul.f32 %v121, %v123
    %v125 = vadd.f32 %v121, %v124
    %vm126 = vweird.f32 %v87
    %vm127 = vweird.f32 %v121
    %vm128 = vmor %vm126, %vm127
    %v129 = vsel %vm128, %v121, %v125
    %v130 = vand.u32 2147483647, %v87
    %vm131 = vcmp.eq.f32.partialorder %v130, 8.507059e+37
    %v132 = vand.u32 %v87, 2147483648
    %v133 = vor.u32 1.1754944e-38, %v132
    %v134 = vsel %vm131, %v133, %v129
    %v135 = vmul.f32 1.0, %v134
    %v136 = vrcp.pop %v88
    %v137 = vmul.f32 %v88, %v136
    %v138 = vsub.f32 1.0, %v137
    %v139 = vmul.f32 %v136, %v138
    %v140 = vadd.f32 %v136, %v139
    %vm141 = vweird.f32 %v88
    %vm142 = vweird.f32 %v136
    %vm143 = vmor %vm141, %vm142
    %v144 = vsel %vm143, %v136, %v140
    %v145 = vand.u32 2147483647, %v88
    %vm146 = vcmp.eq.f32.partialorder %v145, 8.507059e+37
    %v147 = vand.u32 %v88, 2147483648
    %v148 = vor.u32 1.1754944e-38, %v147
    %v149 = vsel %vm146, %v148, %v144
    %v150 = vmul.f32 1.0, %v149
    %v151 = vrcp.pop %v89
    %v152 = vmul.f32 %v89, %v151
    %v153 = vsub.f32 1.0, %v152
    %v154 = vmul.f32 %v151, %v153
    %v155 = vadd.f32 %v151, %v154
    %vm156 = vweird.f32 %v89
    %vm157 = vweird.f32 %v151
    %vm158 = vmor %vm156, %vm157
    %v159 = vsel %vm158, %v151, %v155
    %v160 = vand.u32 2147483647, %v89
    %vm161 = vcmp.eq.f32.partialorder %v160, 8.507059e+37
    %v162 = vand.u32 %v89, 2147483648
    %v163 = vor.u32 1.1754944e-38, %v162
    %v164 = vsel %vm161, %v163, %v159
    %v165 = vmul.f32 1.0, %v164
    %v166 = vrcp.pop %v90
    %v167 = vmul.f32 %v90, %v166
    %v168 = vsub.f32 1.0, %v167
    %v169 = vmul.f32 %v166, %v168
    %v170 = vadd.f32 %v166, %v169
    %vm171 = vweird.f32 %v90
    %vm172 = vweird.f32 %v166
    %vm173 = vmor %vm171, %vm172
    %v174 = vsel %vm173, %v166, %v170
    %v175 = vand.u32 2147483647, %v90
    %vm176 = vcmp.eq.f32.partialorder %v175, 8.507059e+37
    %v177 = vand.u32 %v90, 2147483648
    %v178 = vor.u32 1.1754944e-38, %v177
    %v179 = vsel %vm176, %v178, %v174
    %v180 = vmul.f32 1.0, %v179
    %v181 = vld [vmem:[#allocation4] sm:$0x3]
    %v182 = vld [vmem:[#allocation4 + $0x2] sm:$0x3]
    %v183 = vld [vmem:[#allocation4 + $0x4] sm:$0x3]
    %v184 = vld [vmem:[#allocation4 + $0x6] sm:$0x3]
    %v185 = vld [vmem:[#allocation4 + $0x8] sm:$0x3]
    %v186 = vld [vmem:[#allocation4 + $0xa] sm:$0x3]
    %v187 = vld [vmem:[%s2] sm:$0x3f]
    %v188 = vmul.f32 %v105, %v181
    %v189 = vmul.f32 %v120, %v182
    %v190 = vmul.f32 %v135, %v183
    %v191 = vmul.f32 %v150, %v184
    %v192 = vmul.f32 %v165, %v185
    %v193 = vmul.f32 %v180, %v186
    %vm194 = vcmask 1041408
    %v195 = vsel %vm194, %v188, 0.0
    %v196 = vrot.slane %v195, 4
    %v197 = vadd.f32 %v195, %v196
    %v198 = vrot.slane %v197, 2
    %v199 = vadd.f32 %v197, %v198
    %v200 = vrot.slane %v199, 1
    %v201 = vadd.f32 %v199, %v200
    %v202 = vsel %vm194, %v189, 0.0
    %v203 = vrot.slane %v202, 4
    %v204 = vadd.f32 %v202, %v203
    %v205 = vrot.slane %v204, 2
    %v206 = vadd.f32 %v204, %v205
    %v207 = vrot.slane %v206, 1
    %v208 = vadd.f32 %v206, %v207
    %v209 = vsel %vm194, %v190, 0.0
    %v210 = vrot.slane %v209, 4
    %v211 = vadd.f32 %v209, %v210
    %v212 = vrot.slane %v211, 2
    %v213 = vadd.f32 %v211, %v212
    %v214 = vrot.slane %v213, 1
    %v215 = vadd.f32 %v213, %v214
    %v216 = vsel %vm194, %v191, 0.0
    %v217 = vrot.slane %v216, 4
    %v218 = vadd.f32 %v216, %v217
    %v219 = vrot.slane %v218, 2
    %v220 = vadd.f32 %v218, %v219
    %v221 = vrot.slane %v220, 1
    %v222 = vadd.f32 %v220, %v221
    %v223 = vsel %vm194, %v192, 0.0
    %v224 = vrot.slane %v223, 4
    %v225 = vadd.f32 %v223, %v224
    %v226 = vrot.slane %v225, 2
    %v227 = vadd.f32 %v225, %v226
    %v228 = vrot.slane %v227, 1
    %v229 = vadd.f32 %v227, %v228
    %v230 = vsel %vm194, %v193, 0.0
    %v231 = vrot.slane %v230, 4
    %v232 = vadd.f32 %v230, %v231
    %v233 = vrot.slane %v232, 2
    %v234 = vadd.f32 %v232, %v233
    %v235 = vrot.slane %v234, 1
    %v236 = vadd.f32 %v234, %v235
    %vm243 = vcmask 1041409
    %v244 = vsel %vm243, %v208, %v201
    %vm245 = vcmask 1042434
    %v246 = vsel %vm245, %v215, %v244
    %vm247 = vcmask 1043459
    %v248 = vsel %vm247, %v222, %v246
    %vm249 = vcmask 1044484
    %v250 = vsel %vm249, %v229, %v248
    %vm251 = vcmask 1045509
    %v252 = vsel %vm251, %v236, %v250
    %v254 = vadd.f32 %v187, %v252
    %255 = vst [vmem:[%s2] sm:$0x3f] %v254
    %v256 = vld [vmem:[%s3] sm:$0x3f]
    %v257 = vsel %vm194, %v105, 0.0
    %v258 = vrot.slane %v257, 4
    %v259 = vadd.f32 %v257, %v258
    %v260 = vrot.slane %v259, 2
    %v261 = vadd.f32 %v259, %v260
    %v262 = vrot.slane %v261, 1
    %v263 = vadd.f32 %v261, %v262
    %v264 = vsel %vm194, %v120, 0.0
    %v265 = vrot.slane %v264, 4
    %v266 = vadd.f32 %v264, %v265
    %v267 = vrot.slane %v266, 2
    %v268 = vadd.f32 %v266, %v267
    %v269 = vrot.slane %v268, 1
    %v270 = vadd.f32 %v268, %v269
    %v271 = vsel %vm194, %v135, 0.0
    %v272 = vrot.slane %v271, 4
    %v273 = vadd.f32 %v271, %v272
    %v274 = vrot.slane %v273, 2
    %v275 = vadd.f32 %v273, %v274
    %v276 = vrot.slane %v275, 1
    %v277 = vadd.f32 %v275, %v276
    %v278 = vsel %vm194, %v150, 0.0
    %v279 = vrot.slane %v278, 4
    %v280 = vadd.f32 %v278, %v279
    %v281 = vrot.slane %v280, 2
    %v282 = vadd.f32 %v280, %v281
    %v283 = vrot.slane %v282, 1
    %v284 = vadd.f32 %v282, %v283
    %v285 = vsel %vm194, %v165, 0.0
    %v286 = vrot.slane %v285, 4
    %v287 = vadd.f32 %v285, %v286
    %v288 = vrot.slane %v287, 2
    %v289 = vadd.f32 %v287, %v288
    %v290 = vrot.slane %v289, 1
    %v291 = vadd.f32 %v289, %v290
    %v292 = vsel %vm194, %v180, 0.0
    %v293 = vrot.slane %v292, 4
    %v294 = vadd.f32 %v292, %v293
    %v295 = vrot.slane %v294, 2
    %v296 = vadd.f32 %v294, %v295
    %v297 = vrot.slane %v296, 1
    %v298 = vadd.f32 %v296, %v297
    %v305 = vsel %vm243, %v270, %v263
    %v306 = vsel %vm245, %v277, %v305
    %v307 = vsel %vm247, %v284, %v306
    %v308 = vsel %vm249, %v291, %v307
    %v309 = vsel %vm251, %v298, %v308
    %v311 = vadd.f32 %v256, %v309
    %312 = vst [vmem:[%s3] sm:$0x3f] %v311
    %v313 = vld [vmem:[%s4] sm:$0x3f]
    %v314 = vsel %vm194, %v181, 0.0
    %v315 = vrot.slane %v314, 4
    %v316 = vadd.f32 %v314, %v315
    %v317 = vrot.slane %v316, 2
    %v318 = vadd.f32 %v316, %v317
    %v319 = vrot.slane %v318, 1
    %v320 = vadd.f32 %v318, %v319
    %v321 = vsel %vm194, %v182, 0.0
    %v322 = vrot.slane %v321, 4
    %v323 = vadd.f32 %v321, %v322
    %v324 = vrot.slane %v323, 2
    %v325 = vadd.f32 %v323, %v324
    %v326 = vrot.slane %v325, 1
    %v327 = vadd.f32 %v325, %v326
    %v328 = vsel %vm194, %v183, 0.0
    %v329 = vrot.slane %v328, 4
    %v330 = vadd.f32 %v328, %v329
    %v331 = vrot.slane %v330, 2
    %v332 = vadd.f32 %v330, %v331
    %v333 = vrot.slane %v332, 1
    %v334 = vadd.f32 %v332, %v333
    %v335 = vsel %vm194, %v184, 0.0
    %v336 = vrot.slane %v335, 4
    %v337 = vadd.f32 %v335, %v336
    %v338 = vrot.slane %v337, 2
    %v339 = vadd.f32 %v337, %v338
    %v340 = vrot.slane %v339, 1
    %v341 = vadd.f32 %v339, %v340
    %v342 = vsel %vm194, %v185, 0.0
    %v343 = vrot.slane %v342, 4
    %v344 = vadd.f32 %v342, %v343
    %v345 = vrot.slane %v344, 2
    %v346 = vadd.f32 %v344, %v345
    %v347 = vrot.slane %v346, 1
    %v348 = vadd.f32 %v346, %v347
    %v349 = vsel %vm194, %v186, 0.0
    %v350 = vrot.slane %v349, 4
    %v351 = vadd.f32 %v349, %v350
    %v352 = vrot.slane %v351, 2
    %v353 = vadd.f32 %v351, %v352
    %v354 = vrot.slane %v353, 1
    %v355 = vadd.f32 %v353, %v354
    %v362 = vsel %vm243, %v327, %v320
    %v363 = vsel %vm245, %v334, %v362
    %v364 = vsel %vm247, %v341, %v363
    %v365 = vsel %vm249, %v348, %v364
    %v366 = vsel %vm251, %v355, %v365
    %v368 = vadd.f32 %v313, %v366
    %369 = vst [vmem:[%s4] sm:$0x3f] %v368
    // Predicated region
    $region22: #{tpu_custom_call.1} parent=1 // pred_check
      _
    $region23: #{tpu_custom_call.1} parent=1 // pred_check_branch
      %371 = sbr.rel (0) target = $region25
    $region24: #{tpu_custom_call.1} parent=1 // pred_region
      _
    $region25: #{tpu_custom_call.1} parent=1 // pred_fallthru
      _
    // Predicated region
    $region26: #{tpu_custom_call.1} parent=1 // pred_check
      _
    $region27: #{tpu_custom_call.1} parent=1 // pred_check_branch
      %373 = sbr.rel (0) target = $region29
    $region28: #{tpu_custom_call.1} parent=1 // pred_region
      _
    $region29: #{tpu_custom_call.1} parent=1 // pred_fallthru
      _
    // Predicated region
    $region30: #{tpu_custom_call.1} parent=1 // pred_check
      _
    $region31: #{tpu_custom_call.1} parent=1 // pred_check_branch
      %375 = sbr.rel (0) target = $region33
    $region32: #{tpu_custom_call.1} parent=1 // pred_region
      _
    $region33: #{tpu_custom_call.1} parent=1 // pred_fallthru
      _
    // Predicated region
    $region34: #{tpu_custom_call.1} parent=1 // pred_check
      _
    $region35: #{tpu_custom_call.1} parent=1 // pred_check_branch
      %377 = sbr.rel (0) target = $region37
    $region36: #{tpu_custom_call.1} parent=1 // pred_region
      _
    $region37: #{tpu_custom_call.1} parent=1 // pred_fallthru
      _
    // Predicated region
    $region38: #{tpu_custom_call.1} parent=1 // pred_check
      _
    $region39: #{tpu_custom_call.1} parent=1 // pred_check_branch
      %379 = sbr.rel (0) target = $region41
    $region40: #{tpu_custom_call.1} parent=1 // pred_region
      _
    $region41: #{tpu_custom_call.1} parent=1 // pred_fallthru
      _
    // Predicated region
    $region42: #{tpu_custom_call.1} parent=1 // pred_check
      _
    $region43: #{tpu_custom_call.1} parent=1 // pred_check_branch
      %381 = sbr.rel (0) target = $region45
    $region44: #{tpu_custom_call.1} parent=1 // pred_region
      _
    $region45: #{tpu_custom_call.1} parent=1 // pred_fallthru
      _
    %382 = vsyncpa [#allocation3], 1
    %383 = vsyncpa [#allocation5], 1

</llo_original>
